<compile_context>
chip_gen: v7x
topology: tpu7x:2x2x1
jax: 0.10.0
libtpu: 0.0.40
codegen_flags: <defaults>
</compile_context>

<pallas_src>
from functools import partial

import jax
import jax.numpy as jnp
from jax.experimental import pallas as pl
from jax.experimental.pallas import tpu as pltpu


def _round_up(x, m):
    return (x + m - 1) // m * m


def _pick_block(padded_dim, target, unit=128):
    """Largest multiple of `unit` that divides `padded_dim` and is <= max(target, unit)."""
    target = max(target, unit)
    best = unit
    t = unit
    while t <= min(padded_dim, target):
        if padded_dim % t == 0:
            best = t
        t += unit
    return best


def _linear_relu_kernel_out_acc(x_ref, w_ref, b_ref, o_ref):
    """Variant for f32 outputs: the resident (tm, tn) output block IS the accumulator."""
    # x_ref: (tm, tk) bf16/f32 input tile
    # w_ref: (tk, tn) bf16/f32 weight tile, already (in, out) -> plain matmul, no transpose
    # b_ref: (1, tn)  f32 bias tile (rides with the N tile)
    # o_ref: (tm, tn) f32 output tile, revisited across the K grid axis
    k = pl.program_id(2)

    @pl.when(k == 0)
    def _init():
        o_ref[...] = jnp.zeros_like(o_ref)

    o_ref[...] += jnp.dot(x_ref[...], w_ref[...], preferred_element_type=jnp.float32)
    # TODO(synk): on v7x, verify this lowers to MRB in-place accumulation rather than
    #             pop + VALU-add + VMEM store per K step (bundle dump); unroll sub-K if not.

    @pl.when(k == pl.num_programs(2) - 1)
    def _epilogue():
        o_ref[...] = jnp.maximum(o_ref[...] + b_ref[...], 0.0)


def _linear_relu_kernel_scratch_acc(x_ref, w_ref, b_ref, o_ref, acc_ref):
    """Variant for non-f32 outputs: f32 VMEM accumulator scratch, cast once in epilogue."""
    k = pl.program_id(2)

    @pl.when(k == 0)
    def _init():
        acc_ref[...] = jnp.zeros_like(acc_ref)

    acc_ref[...] += jnp.dot(x_ref[...], w_ref[...], preferred_element_type=jnp.float32)

    @pl.when(k == pl.num_programs(2) - 1)
    def _epilogue():
        o_ref[...] = jnp.maximum(acc_ref[...] + b_ref[...], 0.0).astype(o_ref.dtype)


def prepare_linear_params(weight, bias, *, compute_dtype=jnp.bfloat16):
    """One-time (init-side) parameter prep, hoisted out of the forward path.

    * zero-pads out/in features to multiples of 128 (lane-dense tiles),
    * transposes to (in_f, out_f) so the kernel is a plain (tm,tk)@(tk,tn) on the MXU,
    * casts the weight to the bf16 MXU compute dtype (bias stays f32; it is added on
      the f32 accumulator).

    Args:
      weight: (out_features, in_features) f32 (PyTorch nn.Linear layout)
      bias:   (out_features,) f32
    Returns:
      w_kn: (Kp, Np) compute_dtype padded+transposed weight
      b2d:  (1, Np)  f32 padded bias
    """
    out_f, in_f = weight.shape
    Np = _round_up(out_f, 128)
    Kp = _round_up(in_f, 128)
    w_kn = jnp.pad(weight, ((0, Np - out_f), (0, Kp - in_f))).T.astype(compute_dtype)
    b2d = jnp.pad(bias.astype(jnp.float32), (0, Np - out_f)).reshape(1, Np)
    return w_kn, b2d


@partial(jax.jit, static_argnames=("out_features",))
def flexible_classifier_forward(x, w_kn, b2d, out_features):
    """FlexibleClassifier forward (eval mode): Dropout(identity) -> Linear -> ReLU.

    Args:
      x:            (B, in_features) float32
      w_kn:         (Kp, Np) prepared weight from prepare_linear_params()
      b2d:          (1, Np)  prepared bias from prepare_linear_params()
      out_features: original (unpadded) out_features, static
    Returns:
      (B, out_features) with x's dtype.
    """
    B, in_f = x.shape
    Kp, Np = w_kn.shape
    compute_dtype = w_kn.dtype
    out_dtype = x.dtype

    # ---- tile selection (all trace-time Python) -------------------------------------
    # bf16 packs rows in pairs along sublanes -> round the M tile to 16, not 8.
    m_base = 16 if compute_dtype == jnp.bfloat16 else 8
    if B <= 512:
        # Whole batch in one M tile: the (usually dominant) weight is streamed once.
        tm = _round_up(B, m_base)
    else:
        tm = 512
    Mp = _round_up(B, tm)

    tk = _pick_block(Kp, target=1024)
    tn = _pick_block(Np, target=512)

    # v7x has 2 TensorCores sharded over the "parallel" axes: make sure the parallel
    # grid has >= 2 blocks when the problem allows it.
    if (Mp // tm) * (Np // tn) < 2 and Np >= 256:
        tn = _pick_block(Np, target=Np // 2)

    # VMEM budget (double-buffered bf16 inputs + f32 output + bias) worst case with
    # tm=tn=512, tk=1024: 2*(512*1024 + 1024*512)*2B + 2*512*512*4B + eps ~= 7 MiB.
    # Explicit limit keeps the same tiling safe on v5e (16 MiB scoped default) and
    # leaves headroom without approaching v7x's 64 MiB physical VMEM.
    vmem_limit = 32 * 1024 * 1024

    # ---- per-call input prep (only x varies per call) -------------------------------
    xc = x.astype(compute_dtype)
    if (Mp, Kp) != (B, in_f):
        xc = jnp.pad(xc, ((0, Mp - B), (0, Kp - in_f)))

    grid = (Mp // tm, Np // tn, Kp // tk)  # K last: reduction axis, output-resident

    in_specs = [
        pl.BlockSpec((tm, tk), lambda i, j, k: (i, k)),  # x tile
        pl.BlockSpec((tk, tn), lambda i, j, k: (k, j)),  # weight tile (in, out) layout
        pl.BlockSpec((1, tn), lambda i, j, k: (0, j)),   # bias rides with the N tile
    ]
    out_spec = pl.BlockSpec((tm, tn), lambda i, j, k: (i, j))

    if out_dtype == jnp.float32:
        kernel = _linear_relu_kernel_out_acc
        scratch_shapes = []
    else:
        kernel = _linear_relu_kernel_scratch_acc
        scratch_shapes = [pltpu.VMEM((tm, tn), jnp.float32)]

    out_padded = pl.pallas_call(
        kernel,
        out_shape=jax.ShapeDtypeStruct((Mp, Np), out_dtype),
        grid_spec=pltpu.PrefetchScalarGridSpec(
            num_scalar_prefetch=0,
            grid=grid,
            in_specs=in_specs,
            out_specs=out_spec,
            scratch_shapes=scratch_shapes,
        ),
        compiler_params=pltpu.CompilerParams(
            dimension_semantics=("parallel", "parallel", "arbitrary"),
            vmem_limit_bytes=vmem_limit,
        ),
    )(xc, w_kn, b2d)

    if (Mp, Np) != (B, out_features):
        out_padded = out_padded[:B, :out_features]
    return out_padded


if __name__ == "__main__":
    # Small shapes consistent with the module: batch=8, in_features=32, out_features=16
    B, in_features, out_features = 8, 32, 16

    key = jax.random.PRNGKey(0)
    kx, kw, kb = jax.random.split(key, 3)

    # PyTorch nn.Linear default init: U(-1/sqrt(in), 1/sqrt(in))
    bound = 1.0 / (in_features ** 0.5)
    weight = jax.random.uniform(kw, (out_features, in_features), jnp.float32, -bound, bound)
    bias = jax.random.uniform(kb, (out_features,), jnp.float32, -bound, bound)
    x = jax.random.normal(kx, (B, in_features), jnp.float32)

    # One-time init-side prep (pad + transpose + bf16 cast) -- NOT part of the forward.
    w_kn, b2d = prepare_linear_params(weight, bias)

    out = jax.block_until_ready(flexible_classifier_forward(x, w_kn, b2d, out_features))

    # Reference: dropout(eval)=identity; Linear with bf16 operands / f32 accumulation; ReLU.
    xb = x.astype(jnp.bfloat16).astype(jnp.float32)
    wb = weight.astype(jnp.bfloat16).astype(jnp.float32)
    ref = jnp.maximum(xb @ wb.T + bias, 0.0)
    assert out.shape == (B, out_features)
    assert jnp.allclose(out, ref, atol=1e-3, rtol=1e-3)

    # Second shape: exercises padding, a multi-N-block grid and lane-dense stores.
    B2, in2, out2 = 24, 300, 520
    k2x, k2w, k2b = jax.random.split(jax.random.PRNGKey(1), 3)
    bound2 = 1.0 / (in2 ** 0.5)
    w2 = jax.random.uniform(k2w, (out2, in2), jnp.float32, -bound2, bound2)
    bs2 = jax.random.uniform(k2b, (out2,), jnp.float32, -bound2, bound2)
    x2 = jax.random.normal(k2x, (B2, in2), jnp.float32)
    w2_kn, b2_2d = prepare_linear_params(w2, bs2)
    out2_arr = jax.block_until_ready(flexible_classifier_forward(x2, w2_kn, b2_2d, out2))
    ref2 = jnp.maximum(
        x2.astype(jnp.bfloat16).astype(jnp.float32)
        @ w2.astype(jnp.bfloat16).astype(jnp.float32).T + bs2, 0.0)
    assert out2_arr.shape == (B2, out2)
    assert jnp.allclose(out2_arr, ref2, atol=2e-3, rtol=2e-3)

    print("KERNEL_OK")
</pallas_src>

<mosaic_0001>
module attributes {stable_mosaic.version = 11 : i64} {
  func.func @_linear_relu_kernel_out_acc(%arg0: i32, %arg1: i32, %arg2: i32, %arg3: memref<16x128xbf16, #tpu.memory_space<vmem>>, %arg4: memref<128x128xbf16, #tpu.memory_space<vmem>>, %arg5: memref<1x128xf32, #tpu.memory_space<vmem>>, %arg6: memref<16x128xf32, #tpu.memory_space<vmem>>) attributes {dimension_semantics = [#tpu.dimension_semantics<parallel>, #tpu.dimension_semantics<parallel>, #tpu.dimension_semantics<arbitrary>], iteration_bounds = array<i64: 1, 1, 1>, scalar_prefetch = 0 : i64, scratch_operands = 0 : i64, tpu.core_type = #tpu.core_type<tc>, window_params = [{transform_indices = @transform_0, window_bounds = array<i64: 16, 128>}, {transform_indices = @transform_1, window_bounds = array<i64: 128, 128>}, {transform_indices = @transform_2, window_bounds = array<i64: 1, 128>}, {transform_indices = @transform_3, window_bounds = array<i64: 16, 128>}]} {
    %c0_i32 = arith.constant 0 : i32
    %0 = arith.cmpi eq, %arg2, %c0_i32 : i32
    %1 = arith.extui %0 : i1 to i32
    %c0_i32_0 = arith.constant 0 : i32
    %2 = arith.cmpi ne, %1, %c0_i32_0 : i32
    scf.if %2 {
      %cst_10 = arith.constant 0.000000e+00 : f32
      %12 = vector.broadcast %cst_10 : f32 to vector<16x128xf32>
      %c0_11 = arith.constant 0 : index
      %c0_12 = arith.constant 0 : index
      %13 = vector.load %arg6[%c0_11, %c0_12] : memref<16x128xf32, #tpu.memory_space<vmem>>, vector<16x128xf32>
      tpu.vector_store %arg6[%c0_11, %c0_12], %12 {strides = array<i32>} : memref<16x128xf32, #tpu.memory_space<vmem>>, vector<16x128xf32>,
    } else {
    }
    %c0 = arith.constant 0 : index
    %c0_1 = arith.constant 0 : index
    %3 = vector.load %arg6[%c0, %c0_1] : memref<16x128xf32, #tpu.memory_space<vmem>>, vector<16x128xf32>
    %c0_2 = arith.constant 0 : index
    %c0_3 = arith.constant 0 : index
    %4 = vector.load %arg3[%c0_2, %c0_3] : memref<16x128xbf16, #tpu.memory_space<vmem>>, vector<16x128xbf16>
    %c0_4 = arith.constant 0 : index
    %c0_5 = arith.constant 0 : index
    %5 = vector.load %arg4[%c0_4, %c0_5] : memref<128x128xbf16, #tpu.memory_space<vmem>>, vector<128x128xbf16>
    %cst = arith.constant dense<0.000000e+00> : vector<16x128xf32>
    %6 = tpu.matmul %4, %5, %cst {dimension_numbers = #tpu.dot_dimension_numbers<[1], [0], [0], [1], [0, 0, 1, 1], [], []>} : vector<16x128xbf16>, vector<128x128xbf16>, vector<16x128xf32> -> vector<16x128xf32>
    %7 = arith.addf %3, %6 : vector<16x128xf32>
    %c0_6 = arith.constant 0 : index
    %c0_7 = arith.constant 0 : index
    %8 = vector.load %arg6[%c0_6, %c0_7] : memref<16x128xf32, #tpu.memory_space<vmem>>, vector<16x128xf32>
    tpu.vector_store %arg6[%c0_6, %c0_7], %7 {strides = array<i32>} : memref<16x128xf32, #tpu.memory_space<vmem>>, vector<16x128xf32>,
    %c0_i32_8 = arith.constant 0 : i32
    %9 = arith.cmpi eq, %arg2, %c0_i32_8 : i32
    %10 = arith.extui %9 : i1 to i32
    %c0_i32_9 = arith.constant 0 : i32
    %11 = arith.cmpi ne, %10, %c0_i32_9 : i32
    scf.if %11 {
      %c0_10 = arith.constant 0 : index
      %c0_11 = arith.constant 0 : index
      %12 = vector.load %arg6[%c0_10, %c0_11] : memref<16x128xf32, #tpu.memory_space<vmem>>, vector<16x128xf32>
      %c0_12 = arith.constant 0 : index
      %c0_13 = arith.constant 0 : index
      %13 = vector.load %arg5[%c0_12, %c0_13] : memref<1x128xf32, #tpu.memory_space<vmem>>, vector<1x128xf32>
      %14 = vector.broadcast %13 : vector<1x128xf32> to vector<16x128xf32>
      %15 = arith.addf %12, %14 : vector<16x128xf32>
      %cst_14 = arith.constant 0.000000e+00 : f32
      %16 = vector.broadcast %cst_14 : f32 to vector<16x128xf32>
      %17 = arith.maximumf %15, %16 : vector<16x128xf32>
      %c0_15 = arith.constant 0 : index
      %c0_16 = arith.constant 0 : index
      %18 = vector.load %arg6[%c0_15, %c0_16] : memref<16x128xf32, #tpu.memory_space<vmem>>, vector<16x128xf32>
      tpu.vector_store %arg6[%c0_15, %c0_16], %17 {strides = array<i32>} : memref<16x128xf32, #tpu.memory_space<vmem>>, vector<16x128xf32>,
    } else {
    }
    return
  }
  func.func @transform_0(%arg0: i32, %arg1: i32, %arg2: i32) -> (i32, i32) {
    %c0_i32 = arith.constant 0 : i32
    return %arg0, %arg2 : i32, i32
  }
  func.func @transform_1(%arg0: i32, %arg1: i32, %arg2: i32) -> (i32, i32) {
    %c0_i32 = arith.constant 0 : i32
    return %arg2, %arg1 : i32, i32
  }
  func.func @transform_2(%arg0: i32, %arg1: i32, %arg2: i32) -> (i32, i32) {
    %c0_i32 = arith.constant 0 : i32
    %c0_i32_0 = arith.constant 0 : i32
    return %c0_i32, %arg1 : i32, i32
  }
  func.func @transform_3(%arg0: i32, %arg1: i32, %arg2: i32) -> (i32, i32) {
    %c0_i32 = arith.constant 0 : i32
    return %arg0, %arg1 : i32, i32
  }
}

</mosaic_0001>

<llo_original>
// kernel: flexible_classifier_forward.1
$region0: #{flexible_classifier_forward.1}
  #allocation0 [shape = 'u32[]', space=smem, size = 0x4, offset = 0x4, fixed_abs, tag = 'smem constant byte address 0x4 - core index']
  #allocation1 [shape = 'u32[144,128]{1,0:T(1,128)}', space=vmem, size = 0x12000, scoped, tag = 'internal scratch']
  %s0 = inlined_call_operand.vmem [shape: bf16[16,128], index: 0, kind: input, shape index: {}]
  %s1 = inlined_call_operand.hbm [shape: bf16[128,128], index: 1, kind: input, shape index: {}]
  %s2 = inlined_call_operand.vmem [shape: f32[1,128], index: 2, kind: input, shape index: {}]
  %s3 = inlined_call_operand.vmem [shape: f32[16,128], index: 3, kind: output, shape index: {}]
  %s4 = sld [smem:[#allocation0]]
  $region34: #{flexible_classifier_forward.1} parent=0
    _
  %s6 = ssub.s32 1, %s4
  %s7 = scalar_select 0, %s6, %s4
  $region1: #{flexible_classifier_forward.1} parent=0
    #allocation2 [shape = 'u8[32768]{0}', space=vmem, size = 0x8000, scoped, tag = 'input window, operand 1, single buffered']
    #allocation3 [shape = 's32[1]{0}', space=sflag, size = 0x4, scoped, tag = 'scoped memory for flexible_classifier_forward.1']
    %8 = vsyncpa [#allocation3], 0
    // Predicated region
    $region2: #{flexible_classifier_forward.1} parent=1 // pred_check
      _
    $region3: #{flexible_classifier_forward.1} parent=1 // pred_check_branch
      %10 = sbr.rel (0) target = $region5
    $region4: #{flexible_classifier_forward.1} parent=1 // pred_region
      _
    $region5: #{flexible_classifier_forward.1} parent=1 // pred_fallthru
      _
    // Predicated region
    $region6: #{flexible_classifier_forward.1} parent=1 // pred_check
      _
    $region7: #{flexible_classifier_forward.1} parent=1 // pred_check_branch
      %12 = sbr.rel (0) target = $region9
    $region8: #{flexible_classifier_forward.1} parent=1 // pred_region
      %s14 = ssub.s32 1024, 1024
      %15 = vsyncadd [#allocation3], %s14
      %s16 = sshll.u32 [#allocation2], 4
      %s17 = int_to_ptr.vmem [resolvable:$true] %s16
      %22 = dma.hbm_to_vmem [thread:$0]  %s1, 1024, %s17, [#allocation3], 64, 64, 4
    $region9: #{flexible_classifier_forward.1} parent=1 // pred_fallthru
      _
    // Predicated region
    $region10: #{flexible_classifier_forward.1} parent=1 // pred_check
      _
    $region11: #{flexible_classifier_forward.1} parent=1 // pred_check_branch
      %24 = sbr.rel (0) target = $region13
    $region12: #{flexible_classifier_forward.1} parent=1 // pred_region
      _
    $region13: #{flexible_classifier_forward.1} parent=1 // pred_fallthru
      _
    // Predicated region
    $region14: #{flexible_classifier_forward.1} parent=1 // pred_check
      _
    $region15: #{flexible_classifier_forward.1} parent=1 // pred_check_branch
      %26 = sbr.rel (0) target = $region17
    $region16: #{flexible_classifier_forward.1} parent=1 // pred_region
      %27 = dma.done [#allocation3], 1024
    $region17: #{flexible_classifier_forward.1} parent=1 // pred_fallthru
      _
    %p29 = scmp.eq.s32.totalorder 0, 0
    // Predicated region
    $region18: #{flexible_classifier_forward.1} parent=1 // pred_check
      %p30 = pneg %p29
    $region19: #{flexible_classifier_forward.1} parent=1 // pred_check_branch
      %32 = sbr.rel (%p30) target = $region21
    $region20: #{flexible_classifier_forward.1} parent=1 // pred_region
      %33 = vst [vmem:[%s3] sm:$0xff] 0.0
      %34 = vst [vmem:[%s3 + $0x8] sm:$0xff] 0.0
    $region21: #{flexible_classifier_forward.1} parent=1 // pred_fallthru
      _
    %v35 = vld [vmem:[%s3] sm:$0xff]
    %v36 = vld [vmem:[%s3 + $0x8] sm:$0xff]
    %v37 = vld [vmem:[%s0] sm:$0xf]
    %v38 = vld [vmem:[%s0 + $0x4] sm:$0xf]
    %v39 = vld [vmem:[#allocation2] sm:$0xf]
    %v40 = vld [vmem:[#allocation2 + $0x4] sm:$0xf]
    %v41 = vld [vmem:[#allocation2 + $0x8] sm:$0xf]
    %v42 = vld [vmem:[#allocation2 + $0xc] sm:$0xf]
    %v43 = vld [vmem:[#allocation2 + $0x10] sm:$0xf]
    %v44 = vld [vmem:[#allocation2 + $0x14] sm:$0xf]
    %v45 = vld [vmem:[#allocation2 + $0x18] sm:$0xf]
    %v46 = vld [vmem:[#allocation2 + $0x1c] sm:$0xf]
    %v47 = vld [vmem:[#allocation2 + $0x20] sm:$0xf]
    %v48 = vld [vmem:[#allocation2 + $0x24] sm:$0xf]
    %v49 = vld [vmem:[#allocation2 + $0x28] sm:$0xf]
    %v50 = vld [vmem:[#allocation2 + $0x2c] sm:$0xf]
    %v51 = vld [vmem:[#allocation2 + $0x30] sm:$0xf]
    %v52 = vld [vmem:[#allocation2 + $0x34] sm:$0xf]
    %v53 = vld [vmem:[#allocation2 + $0x38] sm:$0xf]
    %v54 = vld [vmem:[#allocation2 + $0x3c] sm:$0xf]
    %v57 = vunpack.c.l.b16 %v37
    %v58 = vunpack.c.l.b16 %v38
    %v59 = vpack.c.b16 %v58, %v57
    %v77 = vunpack.c.l.b16 %v39
    %v78 = vunpack.c.l.b16 %v40
    %v79 = vunpack.c.l.b16 %v41
    %v80 = vunpack.c.l.b16 %v42
    %v81 = vunpack.c.l.b16 %v43
    %v82 = vunpack.c.l.b16 %v44
    %v83 = vunpack.c.l.b16 %v45
    %v84 = vunpack.c.l.b16 %v46
    %v85 = vunpack.c.l.b16 %v47
    %v86 = vunpack.c.l.b16 %v48
    %v87 = vunpack.c.l.b16 %v49
    %v88 = vunpack.c.l.b16 %v50
    %v89 = vunpack.c.l.b16 %v51
    %v90 = vunpack.c.l.b16 %v52
    %v91 = vunpack.c.l.b16 %v53
    %v92 = vunpack.c.l.b16 %v54
    %v93 = vpack.c.b16 %v78, %v77
    %v94 = vpack.c.b16 %v80, %v79
    %v95 = vpack.c.b16 %v82, %v81
    %v96 = vpack.c.b16 %v84, %v83
    %v97 = vpack.c.b16 %v86, %v85
    %v98 = vpack.c.b16 %v88, %v87
    %v99 = vpack.c.b16 %v90, %v89
    %v100 = vpack.c.b16 %v92, %v91
    %109 = vmatprep.subr.bf16.mxu0 0
    %110 = vmatpush1.bf16.msra.mxu0 %v93
    %111 = vmatprep.subr.bf16.mxu0 0
    %112 = vmatpush1.bf16.msra.mxu0 %v94
    %113 = vmatprep.subr.bf16.mxu0 0
    %114 = vmatpush1.bf16.msra.mxu0 %v95
    %115 = vmatprep.subr.bf16.mxu0 0
    %116 = vmatpush1.bf16.msra.mxu0 %v96
    %117 = vmatprep.subr.bf16.mxu0 0
    %118 = vmatpush1.bf16.msra.mxu0 %v97
    %119 = vmatprep.subr.bf16.mxu0 0
    %120 = vmatpush1.bf16.msra.mxu0 %v98
    %121 = vmatprep.subr.bf16.mxu0 0
    %122 = vmatpush1.bf16.msra.mxu0 %v99
    %123 = vmatprep.subr.bf16.mxu0 0
    %124 = vmatpush1.bf16.msra.mxu0 %v100
    %125 = vmatprep.subr.bf16.mxu0 0
    %126 = vmatpush1.bf16.msra.mxu0 0
    %127 = vmatprep.subr.bf16.mxu0 0
    %128 = vmatpush1.bf16.msra.mxu0 0
    %129 = vmatprep.subr.bf16.mxu0 0
    %130 = vmatpush1.bf16.msra.mxu0 0
    %131 = vmatprep.subr.bf16.mxu0 0
    %132 = vmatpush1.bf16.msra.mxu0 0
    %133 = vmatprep.subr.bf16.mxu0 0
    %134 = vmatpush1.bf16.msra.mxu0 0
    %135 = vmatprep.subr.bf16.mxu0 0
    %136 = vmatpush1.bf16.msra.mxu0 0
    %137 = vmatprep.subr.bf16.mxu0 0
    %138 = vmatpush1.bf16.msra.mxu0 0
    %139 = vmatprep.subr.bf16.mxu0 0
    %140 = vmatpush1.bf16.msra.mxu0 0
    %141 = vmatprep.mubr.bf16.mxu0 0
    %142 = vmatmul.mubr.bf16.gmra.mrb[0].mxu0 %v59
    %v143 = vpop.f32.mrb[0].mxu0
    %v144 = vadd.f32 0.0, %v143
    %v145 = vpop.f32.mrb[0].mxu0
    %v146 = vpop.f32.mrb[0].mxu0
    %v147 = vadd.f32 0.0, %v146
    %v148 = vpop.f32.mrb[0].mxu0
    %149 = vdwg.mxu0
    %v150 = vadd.f32 %v35, %v144
    %v151 = vadd.f32 %v36, %v147
    %152 = vst [vmem:[%s3] sm:$0xff] %v150
    %153 = vst [vmem:[%s3 + $0x8] sm:$0xff] %v151
    // Predicated region
    $region22: #{flexible_classifier_forward.1} parent=1 // pred_check
      %p154 = pneg %p29
    $region23: #{flexible_classifier_forward.1} parent=1 // pred_check_branch
      %156 = sbr.rel (%p154) target = $region25
    $region24: #{flexible_classifier_forward.1} parent=1 // pred_region
      %v157 = vld [vmem:[%s3] sm:$0xff]
      %v158 = vld [vmem:[%s3 + $0x8] sm:$0xff]
      %v159 = vld [vmem:[%s2] sm:$0x1]
      %v161 = vlaneseq
      %v162 = vshrl.u32 %v161, 7
      %v163 = vsub.s32 0, %v162
      %v164 = vrot.slane %v159, %v163
      %v166 = vadd.f32 %v157, %v164
      %v167 = vadd.f32 %v158, %v164
      %v168 = vmax.f32 %v166, 0.0
      %v169 = vmax.f32 %v167, 0.0
      %170 = vst [vmem:[%s3] sm:$0xff] %v168
      %171 = vst [vmem:[%s3 + $0x8] sm:$0xff] %v169
    $region25: #{flexible_classifier_forward.1} parent=1 // pred_fallthru
      _
    // Predicated region
    $region26: #{flexible_classifier_forward.1} parent=1 // pred_check
      _
    $region27: #{flexible_classifier_forward.1} parent=1 // pred_check_branch
      %173 = sbr.rel (0) target = $region29
    $region28: #{flexible_classifier_forward.1} parent=1 // pred_region
      _
    $region29: #{flexible_classifier_forward.1} parent=1 // pred_fallthru
      _
    // Predicated region
    $region30: #{flexible_classifier_forward.1} parent=1 // pred_check
      _
    $region31: #{flexible_classifier_forward.1} parent=1 // pred_check_branch
      %175 = sbr.rel (0) target = $region33
    $region32: #{flexible_classifier_forward.1} parent=1 // pred_region
      _
    $region33: #{flexible_classifier_forward.1} parent=1 // pred_fallthru
      _
    %176 = vsyncpa [#allocation3], 1

</llo_original>
